<compile_context>
chip_gen: v6e
topology: v6e:2x2x1
jax: 0.10.0
libtpu: 0.0.40
codegen_flags: <defaults>
</compile_context>

<pallas_src>
import jax
import jax.numpy as jnp
from jax.experimental import pallas as pl
from jax.experimental.pallas import tpu as pltpu

HIDDEN = 64   # hidden_dim of the reference module


def mlp_kernel(x_ref, wb_ref, w2_ref, w3p_ref, b3_ref, o_ref):
    # Transposed (feature-major) layout, batch on lanes:
    #   x_ref   : (1, tb)  f32   input batch tile
    #   wb_ref  : (H, 3)   f32   packed [w1 | b1 | b2] columns
    #   w2_ref  : (H, H)   bf16  Linear(H,H) weight (PyTorch [out, in] layout)
    #   w3p_ref : (8, H)   bf16  row 0 = w3^T, rows 1..7 = 0 (native 8-sublane LHS)
    #   b3_ref  : (1, 1)   f32   scalar bias in SMEM
    #   o_ref   : (1, tb)  f32   lane-dense output tile
    xt = x_ref[...]                                         # (1, tb)
    w1 = wb_ref[:, 0:1]                                     # (H, 1)
    b1 = wb_ref[:, 1:2]                                     # (H, 1)
    b2 = wb_ref[:, 2:3]                                     # (H, 1)

    # Layer 1: K=1 contraction == outer product -> VPU broadcast mul-add.
    h1 = jnp.maximum(w1 * xt + b1, 0.0)                     # (H, tb) f32

    # Layer 2: the only real matmul; bf16 operands, f32 accumulation on the MXU.
    h2 = jnp.dot(w2_ref[...], h1.astype(jnp.bfloat16),
                 preferred_element_type=jnp.float32)        # (H, tb) f32
    h2 = jnp.maximum(h2 + b2, 0.0)

    # Layer 3: N=1 "matvec" also rides the MXU (8-row zero-padded LHS) instead
    # of a VPU multiply + sublane reduce.  Only row 0 of the result is real.
    y8 = jnp.dot(w3p_ref[...], h2.astype(jnp.bfloat16),
                 preferred_element_type=jnp.float32)        # (8, tb) f32
    o_ref[...] = (y8[0:1, :] + b3_ref[0, 0]).astype(o_ref.dtype)


def _pick_tb(B, tb_max=4096):
    """Batch tile: multiple of 512, large enough to amortise grid-step overhead,
    and (for B > 512) chosen so the grid has >= 2 steps so v7x's two
    TensorCores both get work via the "parallel" grid axis."""
    if B <= 512:
        return 512
    half = -(-B // 2)                       # cdiv(B, 2) -> at least two grid steps
    tb = ((half + 511) // 512) * 512        # round up to a multiple of 512
    return min(tb, tb_max)


def mlp_forward(x, params, *, tb=None, tb_max=4096):
    """x: [B, 1] float32. Returns [B, 1] float32."""
    B = x.shape[0]
    assert x.ndim == 2 and x.shape[1] == 1
    if tb is None:
        tb = _pick_tb(B, tb_max)
    assert tb % 128 == 0, "batch tile must be a multiple of 128 (lane width)"

    H = params["w1"].shape[0]

    # Pack the tiny per-neuron params into single operands (fewer DMA
    # descriptors / semaphores per pipeline step).
    wb = jnp.concatenate([params["w1"], params["b1"], params["b2"]], axis=1)  # (H, 3) f32
    w2 = params["w2"].astype(jnp.bfloat16)                                    # (H, H) bf16
    w3p = jnp.pad(params["w3"].T, ((0, 7), (0, 0))).astype(jnp.bfloat16)      # (8, H) bf16
    b3 = params["b3"].reshape(1, 1).astype(jnp.float32)                       # SMEM scalar

    grid_b = pl.cdiv(B, tb)
    # Free reshape (feature dim is 1): (B,1) -> (1,B); no wrapper-side padding
    # of the batch -- the ragged last block is handled by masked writeback.
    xt = x.reshape(1, B)

    flops = 2 * B * H * (H + 2)
    bytes_accessed = 4 * 2 * B + 2 * H * H + 4 * H * 3 + 2 * 8 * H + 4

    out_t = pl.pallas_call(
        mlp_kernel,
        out_shape=jax.ShapeDtypeStruct((1, B), jnp.float32),
        grid_spec=pltpu.PrefetchScalarGridSpec(
            num_scalar_prefetch=0,
            grid=(grid_b,),
            in_specs=[
                pl.BlockSpec((1, tb), lambda i: (0, i)),    # x tile (batch on lanes)
                pl.BlockSpec((H, 3), lambda i: (0, 0)),     # packed w1|b1|b2
                pl.BlockSpec((H, H), lambda i: (0, 0)),     # w2 (bf16)
                pl.BlockSpec((8, H), lambda i: (0, 0)),     # w3 padded to 8 rows (bf16)
                pl.BlockSpec(memory_space=pltpu.MemorySpace.SMEM),  # b3 scalar
            ],
            out_specs=pl.BlockSpec((1, tb), lambda i: (0, i)),
        ),
        compiler_params=pltpu.CompilerParams(
            # Independent batch tiles -> shards grid steps across TCs on v7x.
            dimension_semantics=("parallel",),
            # NOTE: if tb is ever pushed beyond ~16K (e.g. via tb_max), set
            # vmem_limit_bytes explicitly -- v7x has only 64 MiB physical VMEM.
        ),
        cost_estimate=pl.CostEstimate(
            flops=flops, transcendentals=0, bytes_accessed=bytes_accessed),
    )(xt, wb, w2, w3p, b3)

    return out_t.reshape(B, 1)


def init_params(key, hidden_dim=HIDDEN):
    """Deterministic synthetic init mirroring nn.Linear's U(-1/sqrt(fan_in), +)."""
    k1, k2, k3, k4, k5, k6 = jax.random.split(key, 6)
    s1 = 1.0                                  # fan_in = 1
    s2 = 1.0 / jnp.sqrt(float(hidden_dim))    # fan_in = hidden_dim
    return {
        "w1": jax.random.uniform(k1, (hidden_dim, 1), jnp.float32, -s1, s1),
        "b1": jax.random.uniform(k2, (hidden_dim, 1), jnp.float32, -s1, s1),
        "w2": jax.random.uniform(k3, (hidden_dim, hidden_dim), jnp.float32, -s2, s2),
        "b2": jax.random.uniform(k4, (hidden_dim, 1), jnp.float32, -s2, s2),
        "w3": jax.random.uniform(k5, (hidden_dim, 1), jnp.float32, -s2, s2),
        "b3": jax.random.uniform(k6, (1, 1), jnp.float32, -s2, s2),
    }


def mlp_reference_f32(x, params):
    """Exact-f32 reference of the PyTorch module ([B, feature] layout)."""
    hi = jax.lax.Precision.HIGHEST
    h1 = jnp.maximum(x * params["w1"].T + params["b1"].T, 0.0)              # Linear(1,H)+ReLU
    h2 = jnp.maximum(jnp.dot(h1, params["w2"].T, precision=hi)
                     + params["b2"].T, 0.0)                                  # Linear(H,H)+ReLU
    return jnp.sum(h2 * params["w3"].T, axis=-1, keepdims=True) + params["b3"]


def mlp_reference_mirrored(x, params):
    """Reference mirroring the kernel's pinned bf16-operand / f32-accumulate matmuls."""
    bf = jnp.bfloat16
    h1 = jnp.maximum(x * params["w1"].T + params["b1"].T, 0.0)
    h2 = jnp.dot(h1.astype(bf), params["w2"].astype(bf).T,
                 preferred_element_type=jnp.float32)
    h2 = jnp.maximum(h2 + params["b2"].T, 0.0)
    y = jnp.dot(h2.astype(bf), params["w3"].astype(bf),
                preferred_element_type=jnp.float32)
    return y + params["b3"]


if __name__ == "__main__":
    key = jax.random.PRNGKey(0)
    kp, kx = jax.random.split(key)
    params = init_params(kp, HIDDEN)

    # Small batch, not a multiple of the tile -> exercises the ragged last block
    # (no wrapper-side padding) and gives 2 parallel grid steps.
    B = 1000
    x = jax.random.normal(kx, (B, 1), jnp.float32)

    out = jax.block_until_ready(mlp_forward(x, params))
    assert out.shape == (B, 1)

    ref_mirror = mlp_reference_mirrored(x, params)   # same bf16/f32 matmul recipe
    ref_f32 = mlp_reference_f32(x, params)           # true f32 PyTorch-equivalent

    assert jnp.allclose(out, ref_mirror, atol=5e-3, rtol=5e-3), \
        "mismatch vs bf16-mirrored JAX reference"
    # bf16 layer-2/3 operands trade ~1e-3-level absolute error vs a true f32
    # forward (deliberate, per perf review); check within a bf16-class bound.
    assert jnp.allclose(out, ref_f32, atol=2e-2, rtol=2e-2), \
        "mismatch vs f32 JAX reference"

    print("KERNEL_OK")
</pallas_src>

<mosaic_0001>
module attributes {stable_mosaic.version = 11 : i64} {
  func.func @mlp_kernel(%arg0: i32, %arg1: memref<1x512xf32, #tpu.memory_space<vmem>>, %arg2: memref<64x3xf32, #tpu.memory_space<vmem>>, %arg3: memref<64x64xbf16, #tpu.memory_space<vmem>>, %arg4: memref<8x64xbf16, #tpu.memory_space<vmem>>, %arg5: memref<1x1xf32, #tpu.memory_space<smem>>, %arg6: memref<1x512xf32, #tpu.memory_space<vmem>>) attributes {dimension_semantics = [#tpu.dimension_semantics<parallel>], iteration_bounds = array<i64: 2>, scalar_prefetch = 0 : i64, scratch_operands = 0 : i64, tpu.core_type = #tpu.core_type<tc>, window_params = [{transform_indices = @transform_0, window_bounds = array<i64: 1, 512>}, {pipeline_mode = #tpu.pipeline_mode<synchronous>, transform_indices = @transform_1, window_bounds = array<i64: 64, 3>}, {pipeline_mode = #tpu.pipeline_mode<synchronous>, transform_indices = @transform_2, window_bounds = array<i64: 64, 64>}, {pipeline_mode = #tpu.pipeline_mode<synchronous>, transform_indices = @transform_3, window_bounds = array<i64: 8, 64>}, {transform_indices = @transform_4, window_bounds = array<i64: 1, 1>}, {transform_indices = @transform_5, window_bounds = array<i64: 1, 512>}]} {
    %c0 = arith.constant 0 : index
    %c0_0 = arith.constant 0 : index
    %0 = vector.load %arg1[%c0, %c0_0] : memref<1x512xf32, #tpu.memory_space<vmem>>, vector<1x512xf32>
    %c0_1 = arith.constant 0 : index
    %c0_2 = arith.constant 0 : index
    %1 = vector.load %arg2[%c0_1, %c0_2] : memref<64x3xf32, #tpu.memory_space<vmem>>, vector<64x1xf32>
    %c0_3 = arith.constant 0 : index
    %c1 = arith.constant 1 : index
    %2 = vector.load %arg2[%c0_3, %c1] : memref<64x3xf32, #tpu.memory_space<vmem>>, vector<64x1xf32>
    %c0_4 = arith.constant 0 : index
    %c2 = arith.constant 2 : index
    %3 = vector.load %arg2[%c0_4, %c2] : memref<64x3xf32, #tpu.memory_space<vmem>>, vector<64x1xf32>
    %4 = vector.broadcast %1 : vector<64x1xf32> to vector<64x512xf32>
    %5 = vector.broadcast %0 : vector<1x512xf32> to vector<64x512xf32>
    %6 = arith.mulf %4, %5 : vector<64x512xf32>
    %7 = vector.broadcast %2 : vector<64x1xf32> to vector<64x512xf32>
    %8 = arith.addf %6, %7 : vector<64x512xf32>
    %cst = arith.constant 0.000000e+00 : f32
    %9 = vector.broadcast %cst : f32 to vector<64x512xf32>
    %10 = arith.maximumf %8, %9 : vector<64x512xf32>
    %c0_5 = arith.constant 0 : index
    %c0_6 = arith.constant 0 : index
    %11 = vector.load %arg3[%c0_5, %c0_6] : memref<64x64xbf16, #tpu.memory_space<vmem>>, vector<64x64xbf16>
    %12 = arith.truncf %10 : vector<64x512xf32> to vector<64x512xbf16>
    %cst_7 = arith.constant dense<0.000000e+00> : vector<64x512xf32>
    %13 = tpu.matmul %11, %12, %cst_7 {dimension_numbers = #tpu.dot_dimension_numbers<[1], [0], [0], [1], [0, 0, 1, 1], [], []>} : vector<64x64xbf16>, vector<64x512xbf16>, vector<64x512xf32> -> vector<64x512xf32>
    %14 = vector.broadcast %3 : vector<64x1xf32> to vector<64x512xf32>
    %15 = arith.addf %13, %14 : vector<64x512xf32>
    %cst_8 = arith.constant 0.000000e+00 : f32
    %16 = vector.broadcast %cst_8 : f32 to vector<64x512xf32>
    %17 = arith.maximumf %15, %16 : vector<64x512xf32>
    %c0_9 = arith.constant 0 : index
    %c0_10 = arith.constant 0 : index
    %18 = vector.load %arg4[%c0_9, %c0_10] : memref<8x64xbf16, #tpu.memory_space<vmem>>, vector<8x64xbf16>
    %19 = arith.truncf %17 : vector<64x512xf32> to vector<64x512xbf16>
    %cst_11 = arith.constant dense<0.000000e+00> : vector<8x512xf32>
    %20 = tpu.matmul %18, %19, %cst_11 {dimension_numbers = #tpu.dot_dimension_numbers<[1], [0], [0], [1], [0, 0, 1, 1], [], []>} : vector<8x64xbf16>, vector<64x512xbf16>, vector<8x512xf32> -> vector<8x512xf32>
    %21 = vector.extract_strided_slice %20 {offsets = [0, 0], sizes = [1, 512], strides = [1, 1]} : vector<8x512xf32> to vector<1x512xf32>
    %c0_12 = arith.constant 0 : index
    %c0_13 = arith.constant 0 : index
    %22 = memref.load %arg5[%c0_12, %c0_13] : memref<1x1xf32, #tpu.memory_space<smem>>
    %23 = vector.broadcast %22 : f32 to vector<1x512xf32>
    %24 = arith.addf %21, %23 : vector<1x512xf32>
    %c0_14 = arith.constant 0 : index
    %c0_15 = arith.constant 0 : index
    %25 = vector.load %arg6[%c0_14, %c0_15] : memref<1x512xf32, #tpu.memory_space<vmem>>, vector<1x512xf32>
    tpu.vector_store %arg6[%c0_14, %c0_15], %24 {strides = array<i32>} : memref<1x512xf32, #tpu.memory_space<vmem>>, vector<1x512xf32>,
    return
  }
  func.func @transform_0(%arg0: i32) -> (i32, i32) {
    %c0_i32 = arith.constant 0 : i32
    %c0_i32_0 = arith.constant 0 : i32
    return %c0_i32, %arg0 : i32, i32
  }
  func.func @transform_1(%arg0: i32) -> (i32, i32) {
    %c0_i32 = arith.constant 0 : i32
    %c0_i32_0 = arith.constant 0 : i32
    %c0_i32_1 = arith.constant 0 : i32
    return %c0_i32, %c0_i32_0 : i32, i32
  }
  func.func @transform_2(%arg0: i32) -> (i32, i32) {
    %c0_i32 = arith.constant 0 : i32
    %c0_i32_0 = arith.constant 0 : i32
    %c0_i32_1 = arith.constant 0 : i32
    return %c0_i32, %c0_i32_0 : i32, i32
  }
  func.func @transform_3(%arg0: i32) -> (i32, i32) {
    %c0_i32 = arith.constant 0 : i32
    %c0_i32_0 = arith.constant 0 : i32
    %c0_i32_1 = arith.constant 0 : i32
    return %c0_i32, %c0_i32_0 : i32, i32
  }
  func.func @transform_4(%arg0: i32) -> (i32, i32) {
    %c0_i32 = arith.constant 0 : i32
    %c0_i32_0 = arith.constant 0 : i32
    %c0_i32_1 = arith.constant 0 : i32
    return %c0_i32, %c0_i32_0 : i32, i32
  }
  func.func @transform_5(%arg0: i32) -> (i32, i32) {
    %c0_i32 = arith.constant 0 : i32
    %c0_i32_0 = arith.constant 0 : i32
    return %c0_i32, %arg0 : i32, i32
  }
}

</mosaic_0001>

<llo_original>
// kernel: tpu_custom_call.1
$region0: #{tpu_custom_call.1}
  #allocation0 [shape = 'u32[]', space=smem, size = 0x4, offset = 0x4, fixed_abs, tag = 'smem constant byte address 0x4 - core index']
  #allocation1 [shape = 'u32[144,128]{1,0:T(1,128)}', space=vmem, size = 0x12000, scoped, tag = 'internal scratch']
  #allocation2 [shape = 'f32[1,1]{1,0:T(1,128)S(6)}', space=smem, size = 0x200, scoped, tag = 'scoped memory for tpu_custom_call.1']
  %s0 = inlined_call_operand.vmem [shape: f32[1,1000], index: 0, kind: input, shape index: {}]
  %s1 = inlined_call_operand.vmem [shape: f32[64,3], index: 1, kind: input, shape index: {}]
  %s2 = inlined_call_operand.vmem [shape: bf16[64,64], index: 2, kind: input, shape index: {}]
  %s3 = inlined_call_operand.vmem [shape: bf16[8,64], index: 3, kind: input, shape index: {}]
  %s4 = inlined_call_operand.<no memory space> [shape: f32[1,1], index: 4, kind: input, shape index: {}]
  %s5 = inlined_call_operand.hbm [shape: f32[1,1000], index: 5, kind: output, shape index: {}]
  %s6 = sld [smem:[#allocation0]]
  $region53: #{tpu_custom_call.1} parent=0
    _
  %s8 = ssub.s32 1, %s6
  %s9 = scalar_select 0, %s8, %s6
  %10 = sst [smem:[#allocation2]] %s4
  $region1: #{tpu_custom_call.1} parent=0
    #allocation3 [shape = 'u8[4096]{0}', space=vmem, size = 0x1000, scoped, tag = 'output window, operand 0']
    #allocation4 [shape = 's32[2]{0}', space=sflag, size = 0x8, scoped, tag = 'scoped memory for tpu_custom_call.1']
    %11 = vsyncpa [#allocation4], 0
    %s12 = scalar_lea.sflag [#allocation4], 1
    %13 = vsyncpa %s12, 0
    loop: start=0, step=1, limit=4
    $region2: #{tpu_custom_call.1} parent=1 // loop_pre_header
      _
    $region3: #{tpu_custom_call.1} parent=1 // loop_header
      %s15 = sphi 0, %s19
      %p16 = scmp.ge.s32.totalorder %s15, 4
      %s25 = sphi 0, %s27
      %s28 = sphi 0, %s25
      %s29 = sphi 0, %s28
      %s45 = sphi 0, %s29
      %s49 = sphi 0, %s49
      %s51 = sphi 0, %s49
      %s52 = sphi 0, %s51
      %s66 = sphi 0, %s52
      %s70 = sphi 0, %s70
      %s72 = sphi 0, %s70
      %s73 = sphi 0, %s72
      %s87 = sphi 0, %s73
      %s91 = sphi 0, %s91
      %s93 = sphi 0, %s91
      %s94 = sphi 0, %s93
      %s108 = sphi 0, %s94
      %s112 = sphi 0, %s112
      %s114 = sphi 0, %s112
      %s115 = sphi 0, %s114
      %s129 = sphi 0, %s115
      %s135 = sphi 0, %s137
      %s138 = sphi 0, %s135
      %s139 = sphi 0, %s138
      %s155 = sphi 0, %s139
    $region4: #{tpu_custom_call.1} parent=1 // loop_header_branch
      %18 = sbr.rel (%p16) target = $region8
    $region5: #{tpu_custom_call.1} parent=1 // loop_body
      %s20 = ssub.s32 %s15, 1
      %s21 = ssub.s32 %s15, 2
      %s22 = sadd.s32 %s15, 1
      %s23 = ssub.s32 %s15, %s22
      %p24 = scmp.eq.s32.totalorder %s23, 0
      %s26 = sadd.s32 %s25, 1
      %s27 = scalar_select %p24, %s25, %s26
      %p30 = pneg %p24
      %p31 = scmp.eq.s32.totalorder %s15, 1
      %p32 = por %p30, %p31
      %p33 = scmp.ne.s32.totalorder %s25, %s28
      %p34 = scmp.eq.s32.totalorder %s15, 0
      %p35 = por %p33, %p34
      %p36 = scmp.ne.s32.totalorder %s25, %s28
      %p37 = scmp.eq.s32.totalorder %s20, 1
      %p38 = por %p36, %p37
      %p39 = scmp.ne.s32.totalorder %s28, %s29
      %p40 = scmp.eq.s32.totalorder %s20, 0
      %p41 = por %p39, %p40
      %p42 = scmp.ne.s32.totalorder %s28, %s29
      %p43 = scmp.eq.s32.totalorder %s21, 1
      %p44 = por %p42, %p43
      %p46 = scmp.ne.s32.totalorder %s29, %s45
      %p47 = scmp.eq.s32.totalorder %s21, 0
      %p48 = por %p46, %p47
      %s50 = sadd.s32 %s49, 1
      %p53 = scmp.eq.s32.totalorder %s15, 1
      %p54 = scmp.ne.s32.totalorder %s49, %s51
      %p55 = scmp.eq.s32.totalorder %s15, 0
      %p56 = por %p54, %p55
      %p57 = scmp.ne.s32.totalorder %s49, %s51
      %p58 = scmp.eq.s32.totalorder %s20, 1
      %p59 = por %p57, %p58
      %p60 = scmp.ne.s32.totalorder %s51, %s52
      %p61 = scmp.eq.s32.totalorder %s20, 0
      %p62 = por %p60, %p61
      %p63 = scmp.ne.s32.totalorder %s51, %s52
      %p64 = scmp.eq.s32.totalorder %s21, 1
      %p65 = por %p63, %p64
      %p67 = scmp.ne.s32.totalorder %s52, %s66
      %p68 = scmp.eq.s32.totalorder %s21, 0
      %p69 = por %p67, %p68
      %s71 = sadd.s32 %s70, 1
      %p74 = scmp.eq.s32.totalorder %s15, 1
      %p75 = scmp.ne.s32.totalorder %s70, %s72
      %p76 = scmp.eq.s32.totalorder %s15, 0
      %p77 = por %p75, %p76
      %p78 = scmp.ne.s32.totalorder %s70, %s72
      %p79 = scmp.eq.s32.totalorder %s20, 1
      %p80 = por %p78, %p79
      %p81 = scmp.ne.s32.totalorder %s72, %s73
      %p82 = scmp.eq.s32.totalorder %s20, 0
      %p83 = por %p81, %p82
      %p84 = scmp.ne.s32.totalorder %s72, %s73
      %p85 = scmp.eq.s32.totalorder %s21, 1
      %p86 = por %p84, %p85
      %p88 = scmp.ne.s32.totalorder %s73, %s87
      %p89 = scmp.eq.s32.totalorder %s21, 0
      %p90 = por %p88, %p89
      %s92 = sadd.s32 %s91, 1
      %p95 = scmp.eq.s32.totalorder %s15, 1
      %p96 = scmp.ne.s32.totalorder %s91, %s93
      %p97 = scmp.eq.s32.totalorder %s15, 0
      %p98 = por %p96, %p97
      %p99 = scmp.ne.s32.totalorder %s91, %s93
      %p100 = scmp.eq.s32.totalorder %s20, 1
      %p101 = por %p99, %p100
      %p102 = scmp.ne.s32.totalorder %s93, %s94
      %p103 = scmp.eq.s32.totalorder %s20, 0
      %p104 = por %p102, %p103
      %p105 = scmp.ne.s32.totalorder %s93, %s94
      %p106 = scmp.eq.s32.totalorder %s21, 1
      %p107 = por %p105, %p106
      %p109 = scmp.ne.s32.totalorder %s94, %s108
      %p110 = scmp.eq.s32.totalorder %s21, 0
      %p111 = por %p109, %p110
      %s113 = sadd.s32 %s112, 1
      %p116 = scmp.eq.s32.totalorder %s15, 1
      %p117 = scmp.ne.s32.totalorder %s112, %s114
      %p118 = scmp.eq.s32.totalorder %s15, 0
      %p119 = por %p117, %p118
      %p120 = scmp.ne.s32.totalorder %s112, %s114
      %p121 = scmp.eq.s32.totalorder %s20, 1
      %p122 = por %p120, %p121
      %p123 = scmp.ne.s32.totalorder %s114, %s115
      %p124 = scmp.eq.s32.totalorder %s20, 0
      %p125 = por %p123, %p124
      %p126 = scmp.ne.s32.totalorder %s114, %s115
      %p127 = scmp.eq.s32.totalorder %s21, 1
      %p128 = por %p126, %p127
      %p130 = scmp.ne.s32.totalorder %s115, %s129
      %p131 = scmp.eq.s32.totalorder %s21, 0
      %p132 = por %p130, %p131
      %s133 = ssub.s32 %s15, %s22
      %p134 = scmp.eq.s32.totalorder %s133, 0
      %s136 = sadd.s32 %s135, 1
      %s137 = scalar_select %p134, %s135, %s136
      %p140 = pneg %p134
      %p141 = scmp.eq.s32.totalorder %s15, 1
      %p142 = por %p140, %p141
      %p143 = scmp.ne.s32.totalorder %s135, %s138
      %p144 = scmp.eq.s32.totalorder %s15, 0
      %p145 = por %p143, %p144
      %p146 = scmp.ne.s32.totalorder %s135, %s138
      %p147 = scmp.eq.s32.totalorder %s20, 1
      %p148 = por %p146, %p147
      %p149 = scmp.ne.s32.totalorder %s138, %s139
      %p150 = scmp.eq.s32.totalorder %s20, 0
      %p151 = por %p149, %p150
      %p152 = scmp.ne.s32.totalorder %s138, %s139
      %p153 = scmp.eq.s32.totalorder %s21, 1
      %p154 = por %p152, %p153
      %p156 = scmp.ne.s32.totalorder %s139, %s155
      %p157 = scmp.eq.s32.totalorder %s21, 0
      %p158 = por %p156, %p157
      %p159 = scmp.le.s32.totalorder 1, %s15
      %p160 = scmp.lt.s32.totalorder %s15, 3
      %p161 = pnand %p159, %p160
      %p162 = pneg %p161
      // Predicated region
      $region9: #{tpu_custom_call.1} parent=5 // pred_check
        _
      $region10: #{tpu_custom_call.1} parent=5 // pred_check_branch
        %164 = sbr.rel (%p161) target = $region12
      $region11: #{tpu_custom_call.1} parent=5 // pred_region
        %s165 = ssub.s32 %s15, 1
        // Predicated region
        $region13: #{tpu_custom_call.1} parent=11 // pred_check
          %p166 = pneg %p62
        $region14: #{tpu_custom_call.1} parent=11 // pred_check_branch
          %168 = sbr.rel (%p166) target = $region16
        $region15: #{tpu_custom_call.1} parent=11 // pred_region
          _
        $region16: #{tpu_custom_call.1} parent=11 // pred_fallthru
          _
        // Predicated region
        $region17: #{tpu_custom_call.1} parent=11 // pred_check
          %p169 = pneg %p83
        $region18: #{tpu_custom_call.1} parent=11 // pred_check_branch
          %171 = sbr.rel (%p169) target = $region20
        $region19: #{tpu_custom_call.1} parent=11 // pred_region
          _
        $region20: #{tpu_custom_call.1} parent=11 // pred_fallthru
          _
        // Predicated region
        $region21: #{tpu_custom_call.1} parent=11 // pred_check
          %p172 = pneg %p104
        $region22: #{tpu_custom_call.1} parent=11 // pred_check_branch
          %174 = sbr.rel (%p172) target = $region24
        $region23: #{tpu_custom_call.1} parent=11 // pred_region
          _
        $region24: #{tpu_custom_call.1} parent=11 // pred_fallthru
          _
        // Predicated region
        $region25: #{tpu_custom_call.1} parent=11 // pred_check
          %p175 = pneg %p125
        $region26: #{tpu_custom_call.1} parent=11 // pred_check_branch
          %177 = sbr.rel (%p175) target = $region28
        $region27: #{tpu_custom_call.1} parent=11 // pred_region
          _
        $region28: #{tpu_custom_call.1} parent=11 // pred_fallthru
          _
      $region12: #{tpu_custom_call.1} parent=5 // pred_fallthru
        _
      %p178 = scmp.lt.s32.totalorder %s15, 2
      // Predicated region
      $region29: #{tpu_custom_call.1} parent=5 // pred_check
        %p179 = pneg %p178
      $region30: #{tpu_custom_call.1} parent=5 // pred_check_branch
        %181 = sbr.rel (%p179) target = $region32
      $region31: #{tpu_custom_call.1} parent=5 // pred_region
        // Predicated region
        $region33: #{tpu_custom_call.1} parent=31 // pred_check
          %p182 = pneg %p35
        $region34: #{tpu_custom_call.1} parent=31 // pred_check_branch
          %184 = sbr.rel (%p182) target = $region36
        $region35: #{tpu_custom_call.1} parent=31 // pred_region
          %s185 = smul.u32 4, %s15
          %p186 = scmp.lt.s32.totalorder %s185, 7
          %s187 = scalar_select %p186, %s185, 7
          %s188 = scalar_lea.vmem %s0, %s187
          %s189 = smul.u32 4, %s15
        $region36: #{tpu_custom_call.1} parent=31 // pred_fallthru
          _
      $region32: #{tpu_custom_call.1} parent=5 // pred_fallthru
        _
      %p190 = scmp.le.s32.totalorder 1, %s15
      %p191 = scmp.lt.s32.totalorder %s15, 3
      %p192 = pnand %p190, %p191
      %p193 = pneg %p192
      // Predicated region
      $region37: #{tpu_custom_call.1} parent=5 // pred_check
        _
      $region38: #{tpu_custom_call.1} parent=5 // pred_check_branch
        %195 = sbr.rel (%p192) target = $region40
      $region39: #{tpu_custom_call.1} parent=5 // pred_region
        %s196 = ssub.s32 %s15, 1
        %s197 = smul.u32 4, %s20
        %p198 = scmp.lt.s32.totalorder %s197, 7
        %s199 = scalar_select %p198, %s197, 7
        %s200 = scalar_lea.vmem %s0, %s199
        %p201 = pneg %p41
        %p202 = pneg %p38
        %p203 = pneg %p62
        %p204 = pneg %p59
        %p205 = pneg %p83
        %p206 = pneg %p80
        %p207 = pneg %p104
        %p208 = pneg %p101
        %p209 = pneg %p125
        %p210 = pneg %p122
        %p211 = pneg %p151
        %p212 = pneg %p148
        %s213 = sand.u32 %s138, 1
        %s214 = scalar_lea.sflag [#allocation4], %s213
        %s215 = sand.u32 %s138, 1
        %s216 = smul.addr %s215, 4
        %s217 = scalar_lea.vmem [#allocation3], %s216
        %s218 = smul.u32 4, %s20
        %p219 = scmp.lt.s32.totalorder %s218, 7
        %s220 = scalar_select %p219, %s218, 7
        %s221 = scalar_lea.vmem %s0, %s220
        %s222 = smul.u32 4, %s20
        %s223 = smul.u32 4, %s20
        %v225 = vld [vmem:[%s221] sm:$0xf]
        %v226 = vld [vmem:[%s1] sm:$0xff]
        %v227 = vld [vmem:[%s1 + $0x8] sm:$0xff]
        %v228 = vld [vmem:[%s1 + $0x10] sm:$0xff]
        %v229 = vld [vmem:[%s1 + $0x18] sm:$0xff]
        %v230 = vld [vmem:[%s1 + $0x20] sm:$0xff]
        %v231 = vld [vmem:[%s1 + $0x28] sm:$0xff]
        %v232 = vld [vmem:[%s1 + $0x30] sm:$0xff]
        %v233 = vld [vmem:[%s1 + $0x38] sm:$0xff]
        %235 = vset.pattern.permute.xlu0 0
        %236 = vperm.xlu0 %235, %v226
        %v237 = vpop.permute.xlu0 %236
        %240 = vset.pattern.permute.xlu0 0
        %241 = vperm.xlu0 %240, %v227
        %v242 = vpop.permute.xlu0 %241
        %245 = vset.pattern.permute.xlu0 0
        %246 = vperm.xlu0 %245, %v228
        %v247 = vpop.permute.xlu0 %246
        %250 = vset.pattern.permute.xlu0 0
        %251 = vperm.xlu0 %250, %v229
        %v252 = vpop.permute.xlu0 %251
        %255 = vset.pattern.permute.xlu0 0
        %256 = vperm.xlu0 %255, %v230
        %v257 = vpop.permute.xlu0 %256
        %260 = vset.pattern.permute.xlu0 0
        %261 = vperm.xlu0 %260, %v231
        %v262 = vpop.permute.xlu0 %261
        %265 = vset.pattern.permute.xlu0 0
        %266 = vperm.xlu0 %265, %v232
        %v267 = vpop.permute.xlu0 %266
        %270 = vset.pattern.permute.xlu0 0
        %271 = vperm.xlu0 %270, %v233
        %v272 = vpop.permute.xlu0 %271
        %v275 = vlaneseq
        %v276 = vshrl.u32 %v275, 7
        %v277 = vsub.s32 0, %v276
        %v278 = vrot.slane %v225, %v277
        %v279 = vlaneseq
        %v280 = vshrl.u32 %v279, 7
        %v281 = vsub.s32 1, %v280
        %v282 = vrot.slane %v225, %v281
        %v283 = vlaneseq
        %v284 = vshrl.u32 %v283, 7
        %v285 = vsub.s32 2, %v284
        %v286 = vrot.slane %v225, %v285
        %v287 = vlaneseq
        %v288 = vshrl.u32 %v287, 7
        %v289 = vsub.s32 3, %v288
        %v290 = vrot.slane %v225, %v289
        %v295 = vmul.f32 %v237, %v278
        %v296 = vmul.f32 %v237, %v282
        %v297 = vmul.f32 %v237, %v286
        %v298 = vmul.f32 %v237, %v290
        %v299 = vmul.f32 %v242, %v278
        %v300 = vmul.f32 %v242, %v282
        %v301 = vmul.f32 %v242, %v286
        %v302 = vmul.f32 %v242, %v290
        %v303 = vmul.f32 %v247, %v278
        %v304 = vmul.f32 %v247, %v282
        %v305 = vmul.f32 %v247, %v286
        %v306 = vmul.f32 %v247, %v290
        %v307 = vmul.f32 %v252, %v278
        %v308 = vmul.f32 %v252, %v282
        %v309 = vmul.f32 %v252, %v286
        %v310 = vmul.f32 %v252, %v290
        %v311 = vmul.f32 %v257, %v278
        %v312 = vmul.f32 %v257, %v282
        %v313 = vmul.f32 %v257, %v286
        %v314 = vmul.f32 %v257, %v290
        %v315 = vmul.f32 %v262, %v278
        %v316 = vmul.f32 %v262, %v282
        %v317 = vmul.f32 %v262, %v286
        %v318 = vmul.f32 %v262, %v290
        %v319 = vmul.f32 %v267, %v278
        %v320 = vmul.f32 %v267, %v282
        %v321 = vmul.f32 %v267, %v286
        %v322 = vmul.f32 %v267, %v290
        %v323 = vmul.f32 %v272, %v278
        %v324 = vmul.f32 %v272, %v282
        %v325 = vmul.f32 %v272, %v286
        %v326 = vmul.f32 %v272, %v290
        %327 = vset.pattern.permute.xlu0 1
        %328 = vperm.xlu0 %327, %v226
        %v329 = vpop.permute.xlu0 %328
        %331 = vset.pattern.permute.xlu0 1
        %332 = vperm.xlu0 %331, %v227
        %v333 = vpop.permute.xlu0 %332
        %335 = vset.pattern.permute.xlu0 1
        %336 = vperm.xlu0 %335, %v228
        %v337 = vpop.permute.xlu0 %336
        %339 = vset.pattern.permute.xlu0 1
        %340 = vperm.xlu0 %339, %v229
        %v341 = vpop.permute.xlu0 %340
        %343 = vset.pattern.permute.xlu0 1
        %344 = vperm.xlu0 %343, %v230
        %v345 = vpop.permute.xlu0 %344
        %347 = vset.pattern.permute.xlu0 1
        %348 = vperm.xlu0 %347, %v231
        %v349 = vpop.permute.xlu0 %348
        %351 = vset.pattern.permute.xlu0 1
        %352 = vperm.xlu0 %351, %v232
        %v353 = vpop.permute.xlu0 %352
        %355 = vset.pattern.permute.xlu0 1
        %356 = vperm.xlu0 %355, %v233
        %v357 = vpop.permute.xlu0 %356
        %v359 = vadd.f32 %v295, %v329
        %v360 = vadd.f32 %v296, %v329
        %v361 = vadd.f32 %v297, %v329
        %v362 = vadd.f32 %v298, %v329
        %v363 = vadd.f32 %v299, %v333
        %v364 = vadd.f32 %v300, %v333
        %v365 = vadd.f32 %v301, %v333
        %v366 = vadd.f32 %v302, %v333
        %v367 = vadd.f32 %v303, %v337
        %v368 = vadd.f32 %v304, %v337
        %v369 = vadd.f32 %v305, %v337
        %v370 = vadd.f32 %v306, %v337
        %v371 = vadd.f32 %v307, %v341
        %v372 = vadd.f32 %v308, %v341
        %v373 = vadd.f32 %v309, %v341
        %v374 = vadd.f32 %v310, %v341
        %v375 = vadd.f32 %v311, %v345
        %v376 = vadd.f32 %v312, %v345
        %v377 = vadd.f32 %v313, %v345
        %v378 = vadd.f32 %v314, %v345
        %v379 = vadd.f32 %v315, %v349
        %v380 = vadd.f32 %v316, %v349
        %v381 = vadd.f32 %v317, %v349
        %v382 = vadd.f32 %v318, %v349
        %v383 = vadd.f32 %v319, %v353
        %v384 = vadd.f32 %v320, %v353
        %v385 = vadd.f32 %v321, %v353
        %v386 = vadd.f32 %v322, %v353
        %v387 = vadd.f32 %v323, %v357
        %v388 = vadd.f32 %v324, %v357
        %v389 = vadd.f32 %v325, %v357
        %v390 = vadd.f32 %v326, %v357
        %v391 = vmax.f32 %v359, 0.0
        %v392 = vmax.f32 %v360, 0.0
        %v393 = vmax.f32 %v361, 0.0
        %v394 = vmax.f32 %v362, 0.0
        %v395 = vmax.f32 %v363, 0.0
        %v396 = vmax.f32 %v364, 0.0
        %v397 = vmax.f32 %v365, 0.0
        %v398 = vmax.f32 %v366, 0.0
        %v399 = vmax.f32 %v367, 0.0
        %v400 = vmax.f32 %v368, 0.0
        %v401 = vmax.f32 %v369, 0.0
        %v402 = vmax.f32 %v370, 0.0
        %v403 = vmax.f32 %v371, 0.0
        %v404 = vmax.f32 %v372, 0.0
        %v405 = vmax.f32 %v373, 0.0
        %v406 = vmax.f32 %v374, 0.0
        %v407 = vmax.f32 %v375, 0.0
        %v408 = vmax.f32 %v376, 0.0
        %v409 = vmax.f32 %v377, 0.0
        %v410 = vmax.f32 %v378, 0.0
        %v411 = vmax.f32 %v379, 0.0
        %v412 = vmax.f32 %v380, 0.0
        %v413 = vmax.f32 %v381, 0.0
        %v414 = vmax.f32 %v382, 0.0
        %v415 = vmax.f32 %v383, 0.0
        %v416 = vmax.f32 %v384, 0.0
        %v417 = vmax.f32 %v385, 0.0
        %v418 = vmax.f32 %v386, 0.0
        %v419 = vmax.f32 %v387, 0.0
        %v420 = vmax.f32 %v388, 0.0
        %v421 = vmax.f32 %v389, 0.0
        %v422 = vmax.f32 %v390, 0.0
        %v423 = vld [vmem:[%s2] sm:$0xf]
        %v424 = vld [vmem:[%s2 + $0x4] sm:$0xf]
        %v425 = vld [vmem:[%s2 + $0x8] sm:$0xf]
        %v426 = vld [vmem:[%s2 + $0xc] sm:$0xf]
        %v427 = vld [vmem:[%s2 + $0x10] sm:$0xf]
        %v428 = vld [vmem:[%s2 + $0x14] sm:$0xf]
        %v429 = vld [vmem:[%s2 + $0x18] sm:$0xf]
        %v430 = vld [vmem:[%s2 + $0x1c] sm:$0xf]
        %v431 = vpack.c.bf16 %v395, %v391
        %v432 = vpack.c.bf16 %v396, %v392
        %v433 = vpack.c.bf16 %v397, %v393
        %v434 = vpack.c.bf16 %v398, %v394
        %v435 = vpack.c.bf16 %v403, %v399
        %v436 = vpack.c.bf16 %v404, %v400
        %v437 = vpack.c.bf16 %v405, %v401
        %v438 = vpack.c.bf16 %v406, %v402
        %v439 = vpack.c.bf16 %v411, %v407
        %v440 = vpack.c.bf16 %v412, %v408
        %v441 = vpack.c.bf16 %v413, %v409
        %v442 = vpack.c.bf16 %v414, %v410
        %v443 = vpack.c.bf16 %v419, %v415
        %v444 = vpack.c.bf16 %v420, %v416
        %v445 = vpack.c.bf16 %v421, %v417
        %v446 = vpack.c.bf16 %v422, %v418
        %447 = vset.pattern.permute.xlu0 2
        %448 = vperm.xlu0 %447, %v226
        %v449 = vpop.permute.xlu0 %448
        %451 = vset.pattern.permute.xlu0 2
        %452 = vperm.xlu0 %451, %v227
        %v453 = vpop.permute.xlu0 %452
        %455 = vset.pattern.permute.xlu0 2
        %456 = vperm.xlu0 %455, %v228
        %v457 = vpop.permute.xlu0 %456
        %459 = vset.pattern.permute.xlu0 2
        %460 = vperm.xlu0 %459, %v229
        %v461 = vpop.permute.xlu0 %460
        %463 = vset.pattern.permute.xlu0 2
        %464 = vperm.xlu0 %463, %v230
        %v465 = vpop.permute.xlu0 %464
        %467 = vset.pattern.permute.xlu0 2
        %468 = vperm.xlu0 %467, %v231
        %v469 = vpop.permute.xlu0 %468
        %471 = vset.pattern.permute.xlu0 2
        %472 = vperm.xlu0 %471, %v232
        %v473 = vpop.permute.xlu0 %472
        %475 = vset.pattern.permute.xlu0 2
        %476 = vperm.xlu0 %475, %v233
        %v477 = vpop.permute.xlu0 %476
        %v487 = vunpack.c.l.b16 %v423
        %v488 = vunpack.c.l.b16 %v424
        %v489 = vunpack.c.l.b16 %v425
        %v490 = vunpack.c.l.b16 %v426
        %v491 = vunpack.c.l.b16 %v427
        %v492 = vunpack.c.l.b16 %v428
        %v493 = vunpack.c.l.b16 %v429
        %v494 = vunpack.c.l.b16 %v430
        %v495 = vpack.c.b16 %v488, %v487
        %v496 = vpack.c.b16 %v490, %v489
        %v497 = vpack.c.b16 %v492, %v491
        %v498 = vpack.c.b16 %v494, %v493
        %vm499 = vcmask 523264
        %v501 = vsel %vm499, %v495, 0
        %v504 = vsel %vm499, %v496, 0
        %v507 = vsel %vm499, %v497, 0
        %v510 = vsel %vm499, %v498, 0
        %512 = vmatprep.subr.bf16.mxu0 0
        %513 = vmatpush1.bf16.msra.mxu0 0
        %514 = vmatprep.subr.bf16.mxu0 0
        %515 = vmatpush1.bf16.msra.mxu0 0
        %516 = vmatprep.subr.bf16.mxu0 0
        %517 = vmatpush1.bf16.msra.mxu0 0
        %518 = vmatprep.subr.bf16.mxu0 0
        %519 = vmatpush1.bf16.msra.mxu0 0
        %520 = vmatprep.subr.bf16.mxu0 %v444
        %521 = vmatpush1.bf16.msra.mxu0 %v443
        %522 = vmatprep.subr.bf16.mxu0 %v440
        %523 = vmatpush1.bf16.msra.mxu0 %v439
        %524 = vmatprep.subr.bf16.mxu0 %v436
        %525 = vmatpush1.bf16.msra.mxu0 %v435
        %526 = vmatprep.subr.bf16.mxu0 %v432
        %527 = vmatpush1.bf16.msra.mxu0 %v431
        %528 = vmatprep.subr.bf16.mxu0 0
        %529 = vmatpush2.bf16.msra.mxu0 0
        %530 = vmatprep.subr.bf16.mxu0 0
        %531 = vmatpush2.bf16.msra.mxu0 0
        %532 = vmatprep.subr.bf16.mxu0 0
        %533 = vmatpush2.bf16.msra.mxu0 0
        %534 = vmatprep.subr.bf16.mxu0 0
        %535 = vmatpush2.bf16.msra.mxu0 0
        %536 = vmatprep.subr.bf16.mxu0 0
        %537 = vmatpush2.bf16.msra.mxu0 0
        %538 = vmatprep.subr.bf16.mxu0 0
        %539 = vmatpush2.bf16.msra.mxu0 0
        %540 = vmatprep.subr.bf16.mxu0 0
        %541 = vmatpush2.bf16.msra.mxu0 0
        %542 = vmatprep.subr.bf16.mxu0 0
        %543 = vmatpush2.bf16.msra.mxu0 0
        %544 = vmatprep.mubr.bf16.mxu0 0
        %545 = vmatmul.mubr.bf16.gmra.mxu0 %v501
        %v546 = vpop.f32.mrf.mxu0
        %v547 = vadd.f32 %v449, %v546
        %v548 = vpop.f32.mrf.mxu0
        %v549 = vadd.f32 %v449, %v548
        %v550 = vpop.f32.mrf.mxu0
        %v551 = vadd.f32 %v453, %v550
        %v552 = vpop.f32.mrf.mxu0
        %v553 = vadd.f32 %v453, %v552
        %554 = vmatprep.mubr.bf16.mxu0 0
        %555 = vmatmul.mubr.bf16.gmra.mxu0 %v504
        %v556 = vpop.f32.mrf.mxu0
        %v557 = vadd.f32 %v457, %v556
        %v558 = vpop.f32.mrf.mxu0
        %v559 = vadd.f32 %v457, %v558
        %v560 = vpop.f32.mrf.mxu0
        %v561 = vadd.f32 %v461, %v560
        %v562 = vpop.f32.mrf.mxu0
        %v563 = vadd.f32 %v461, %v562
        %564 = vmatprep.mubr.bf16.mxu0 0
        %565 = vmatmul.mubr.bf16.gmra.mxu0 %v507
        %v566 = vpop.f32.mrf.mxu0
        %v567 = vadd.f32 %v465, %v566
        %v568 = vpop.f32.mrf.mxu0
        %v569 = vadd.f32 %v465, %v568
        %v570 = vpop.f32.mrf.mxu0
        %v571 = vadd.f32 %v469, %v570
        %v572 = vpop.f32.mrf.mxu0
        %v573 = vadd.f32 %v469, %v572
        %574 = vmatprep.mubr.bf16.mxu0 0
        %575 = vmatmul.mubr.bf16.gmra.mxu0 %v510
        %v576 = vpop.f32.mrf.mxu0
        %v577 = vadd.f32 %v473, %v576
        %v578 = vpop.f32.mrf.mxu0
        %v579 = vadd.f32 %v473, %v578
        %v580 = vpop.f32.mrf.mxu0
        %v581 = vadd.f32 %v477, %v580
        %v582 = vpop.f32.mrf.mxu0
        %v583 = vadd.f32 %v477, %v582
        %584 = vdwg.mxu0
        %585 = vmatprep.subr.bf16.mxu0 0
        %586 = vmatpush1.bf16.msra.mxu0 0
        %587 = vmatprep.subr.bf16.mxu0 0
        %588 = vmatpush1.bf16.msra.mxu0 0
        %589 = vmatprep.subr.bf16.mxu0 0
        %590 = vmatpush1.bf16.msra.mxu0 0
        %591 = vmatprep.subr.bf16.mxu0 0
        %592 = vmatpush1.bf16.msra.mxu0 0
        %593 = vmatprep.subr.bf16.mxu0 %v446
        %594 = vmatpush1.bf16.msra.mxu0 %v445
        %595 = vmatprep.subr.bf16.mxu0 %v442
        %596 = vmatpush1.bf16.msra.mxu0 %v441
        %597 = vmatprep.subr.bf16.mxu0 %v438
        %598 = vmatpush1.bf16.msra.mxu0 %v437
        %599 = vmatprep.subr.bf16.mxu0 %v434
        %600 = vmatpush1.bf16.msra.mxu0 %v433
        %601 = vmatprep.subr.bf16.mxu0 0
        %602 = vmatpush2.bf16.msra.mxu0 0
        %603 = vmatprep.subr.bf16.mxu0 0
        %604 = vmatpush2.bf16.msra.mxu0 0
        %605 = vmatprep.subr.bf16.mxu0 0
        %606 = vmatpush2.bf16.msra.mxu0 0
        %607 = vmatprep.subr.bf16.mxu0 0
        %608 = vmatpush2.bf16.msra.mxu0 0
        %609 = vmatprep.subr.bf16.mxu0 0
        %610 = vmatpush2.bf16.msra.mxu0 0
        %611 = vmatprep.subr.bf16.mxu0 0
        %612 = vmatpush2.bf16.msra.mxu0 0
        %613 = vmatprep.subr.bf16.mxu0 0
        %614 = vmatpush2.bf16.msra.mxu0 0
        %615 = vmatprep.subr.bf16.mxu0 0
        %616 = vmatpush2.bf16.msra.mxu0 0
        %617 = vmatprep.mubr.bf16.mxu0 0
        %618 = vmatmul.mubr.bf16.gmra.mxu0 %v501
        %v619 = vpop.f32.mrf.mxu0
        %v620 = vadd.f32 %v449, %v619
        %v621 = vpop.f32.mrf.mxu0
        %v622 = vadd.f32 %v449, %v621
        %v623 = vpop.f32.mrf.mxu0
        %v624 = vadd.f32 %v453, %v623
        %v625 = vpop.f32.mrf.mxu0
        %v626 = vadd.f32 %v453, %v625
        %627 = vmatprep.mubr.bf16.mxu0 0
        %628 = vmatmul.mubr.bf16.gmra.mxu0 %v504
        %v629 = vpop.f32.mrf.mxu0
        %v630 = vadd.f32 %v457, %v629
        %v631 = vpop.f32.mrf.mxu0
        %v632 = vadd.f32 %v457, %v631
        %v633 = vpop.f32.mrf.mxu0
        %v634 = vadd.f32 %v461, %v633
        %v635 = vpop.f32.mrf.mxu0
        %v636 = vadd.f32 %v461, %v635
        %637 = vmatprep.mubr.bf16.mxu0 0
        %638 = vmatmul.mubr.bf16.gmra.mxu0 %v507
        %v639 = vpop.f32.mrf.mxu0
        %v640 = vadd.f32 %v465, %v639
        %v641 = vpop.f32.mrf.mxu0
        %v642 = vadd.f32 %v465, %v641
        %v643 = vpop.f32.mrf.mxu0
        %v644 = vadd.f32 %v469, %v643
        %v645 = vpop.f32.mrf.mxu0
        %v646 = vadd.f32 %v469, %v645
        %647 = vmatprep.mubr.bf16.mxu0 0
        %648 = vmatmul.mubr.bf16.gmra.mxu0 %v510
        %v649 = vpop.f32.mrf.mxu0
        %v650 = vadd.f32 %v473, %v649
        %v651 = vpop.f32.mrf.mxu0
        %v652 = vadd.f32 %v473, %v651
        %v653 = vpop.f32.mrf.mxu0
        %v654 = vadd.f32 %v477, %v653
        %v655 = vpop.f32.mrf.mxu0
        %v656 = vadd.f32 %v477, %v655
        %657 = vdwg.mxu0
        %v658 = vmax.f32 %v547, 0.0
        %v659 = vmax.f32 %v549, 0.0
        %v660 = vmax.f32 %v620, 0.0
        %v661 = vmax.f32 %v622, 0.0
        %v662 = vmax.f32 %v551, 0.0
        %v663 = vmax.f32 %v553, 0.0
        %v664 = vmax.f32 %v624, 0.0
        %v665 = vmax.f32 %v626, 0.0
        %v666 = vmax.f32 %v557, 0.0
        %v667 = vmax.f32 %v559, 0.0
        %v668 = vmax.f32 %v630, 0.0
        %v669 = vmax.f32 %v632, 0.0
        %v670 = vmax.f32 %v561, 0.0
        %v671 = vmax.f32 %v563, 0.0
        %v672 = vmax.f32 %v634, 0.0
        %v673 = vmax.f32 %v636, 0.0
        %v674 = vmax.f32 %v567, 0.0
        %v675 = vmax.f32 %v569, 0.0
        %v676 = vmax.f32 %v640, 0.0
        %v677 = vmax.f32 %v642, 0.0
        %v678 = vmax.f32 %v571, 0.0
        %v679 = vmax.f32 %v573, 0.0
        %v680 = vmax.f32 %v644, 0.0
        %v681 = vmax.f32 %v646, 0.0
        %v682 = vmax.f32 %v577, 0.0
        %v683 = vmax.f32 %v579, 0.0
        %v684 = vmax.f32 %v650, 0.0
        %v685 = vmax.f32 %v652, 0.0
        %v686 = vmax.f32 %v581, 0.0
        %v687 = vmax.f32 %v583, 0.0
        %v688 = vmax.f32 %v654, 0.0
        %v689 = vmax.f32 %v656, 0.0
        %v690 = vld [vmem:[%s3] sm:$0xf]
        %v691 = vpack.c.bf16 %v662, %v658
        %v692 = vpack.c.bf16 %v663, %v659
        %v693 = vpack.c.bf16 %v664, %v660
        %v694 = vpack.c.bf16 %v665, %v661
        %v695 = vpack.c.bf16 %v670, %v666
        %v696 = vpack.c.bf16 %v671, %v667
        %v697 = vpack.c.bf16 %v672, %v668
        %v698 = vpack.c.bf16 %v673, %v669
        %v699 = vpack.c.bf16 %v678, %v674
        %v700 = vpack.c.bf16 %v679, %v675
        %v701 = vpack.c.bf16 %v680, %v676
        %v702 = vpack.c.bf16 %v681, %v677
        %v703 = vpack.c.bf16 %v686, %v682
        %v704 = vpack.c.bf16 %v687, %v683
        %v705 = vpack.c.bf16 %v688, %v684
        %v706 = vpack.c.bf16 %v689, %v685
        %v708 = vsel %vm499, %v690, 0
        %710 = vmatprep.subr.bf16.mxu0 0
        %711 = vmatpush1.bf16.msra.mxu0 0
        %712 = vmatprep.subr.bf16.mxu0 0
        %713 = vmatpush1.bf16.msra.mxu0 0
        %714 = vmatprep.subr.bf16.mxu0 0
        %715 = vmatpush1.bf16.msra.mxu0 0
        %716 = vmatprep.subr.bf16.mxu0 0
        %717 = vmatpush1.bf16.msra.mxu0 0
        %718 = vmatprep.subr.bf16.mxu0 %v704
        %719 = vmatpush1.bf16.msra.mxu0 %v703
        %720 = vmatprep.subr.bf16.mxu0 %v700
        %721 = vmatpush1.bf16.msra.mxu0 %v699
        %722 = vmatprep.subr.bf16.mxu0 %v696
        %723 = vmatpush1.bf16.msra.mxu0 %v695
        %724 = vmatprep.subr.bf16.mxu0 %v692
        %725 = vmatpush1.bf16.msra.mxu0 %v691
        %726 = vmatprep.subr.bf16.mxu0 0
        %727 = vmatpush2.bf16.msra.mxu0 0
        %728 = vmatprep.subr.bf16.mxu0 0
        %729 = vmatpush2.bf16.msra.mxu0 0
        %730 = vmatprep.subr.bf16.mxu0 0
        %731 = vmatpush2.bf16.msra.mxu0 0
        %732 = vmatprep.subr.bf16.mxu0 0
        %733 = vmatpush2.bf16.msra.mxu0 0
        %734 = vmatprep.subr.bf16.mxu0 0
        %735 = vmatpush2.bf16.msra.mxu0 0
        %736 = vmatprep.subr.bf16.mxu0 0
        %737 = vmatpush2.bf16.msra.mxu0 0
        %738 = vmatprep.subr.bf16.mxu0 0
        %739 = vmatpush2.bf16.msra.mxu0 0
        %740 = vmatprep.subr.bf16.mxu0 0
        %741 = vmatpush2.bf16.msra.mxu0 0
        %742 = vmatprep.mubr.bf16.mxu0 0
        %743 = vmatmul.mubr.bf16.gmra.mxu0 %v708
        %v744 = vpop.f32.mrf.mxu0
        %v745 = vadd.f32 0.0, %v744
        %v746 = vpop.f32.mrf.mxu0
        %v747 = vadd.f32 0.0, %v746
        %v748 = vpop.f32.mrf.mxu0
        %v749 = vpop.f32.mrf.mxu0
        %750 = vdwg.mxu0
        %751 = vmatprep.subr.bf16.mxu0 0
        %752 = vmatpush1.bf16.msra.mxu0 0
        %753 = vmatprep.subr.bf16.mxu0 0
        %754 = vmatpush1.bf16.msra.mxu0 0
        %755 = vmatprep.subr.bf16.mxu0 0
        %756 = vmatpush1.bf16.msra.mxu0 0
        %757 = vmatprep.subr.bf16.mxu0 0
        %758 = vmatpush1.bf16.msra.mxu0 0
        %759 = vmatprep.subr.bf16.mxu0 %v706
        %760 = vmatpush1.bf16.msra.mxu0 %v705
        %761 = vmatprep.subr.bf16.mxu0 %v702
        %762 = vmatpush1.bf16.msra.mxu0 %v701
        %763 = vmatprep.subr.bf16.mxu0 %v698
        %764 = vmatpush1.bf16.msra.mxu0 %v697
        %765 = vmatprep.subr.bf16.mxu0 %v694
        %766 = vmatpush1.bf16.msra.mxu0 %v693
        %767 = vmatprep.subr.bf16.mxu0 0
        %768 = vmatpush2.bf16.msra.mxu0 0
        %769 = vmatprep.subr.bf16.mxu0 0
        %770 = vmatpush2.bf16.msra.mxu0 0
        %771 = vmatprep.subr.bf16.mxu0 0
        %772 = vmatpush2.bf16.msra.mxu0 0
        %773 = vmatprep.subr.bf16.mxu0 0
        %774 = vmatpush2.bf16.msra.mxu0 0
        %775 = vmatprep.subr.bf16.mxu0 0
        %776 = vmatpush2.bf16.msra.mxu0 0
        %777 = vmatprep.subr.bf16.mxu0 0
        %778 = vmatpush2.bf16.msra.mxu0 0
        %779 = vmatprep.subr.bf16.mxu0 0
        %780 = vmatpush2.bf16.msra.mxu0 0
        %781 = vmatprep.subr.bf16.mxu0 0
        %782 = vmatpush2.bf16.msra.mxu0 0
        %783 = vmatprep.mubr.bf16.mxu0 0
        %784 = vmatmul.mubr.bf16.gmra.mxu0 %v708
        %v785 = vpop.f32.mrf.mxu0
        %v786 = vadd.f32 0.0, %v785
        %v787 = vpop.f32.mrf.mxu0
        %v788 = vadd.f32 0.0, %v787
        %v789 = vpop.f32.mrf.mxu0
        %v790 = vpop.f32.mrf.mxu0
        %791 = vdwg.mxu0
        %s792 = sld [smem:[#allocation2]]
        %v793 = vstv %s792
        %v794 = vadd.f32 %v745, %v793
        %v795 = vadd.f32 %v747, %v793
        %v796 = vadd.f32 %v786, %v793
        %v797 = vadd.f32 %v788, %v793
        %v802 = vcombine.low %v794, %v795
        %v803 = vcombine.low %v796, %v797
        %v805 = vunpack.c.l.s4 1966171168
        %v806 = vunpack.c.0.s8 %v805
        %v807 = vlaneseq
        %v808 = vshrl.u32 %v807, 7
        %v809 = vsub.s32 %v806, %v808
        %v810 = vrot.slane %v802, %v809
        %v812 = vunpack.c.l.s4 1966171168
        %v813 = vunpack.c.0.s8 %v812
        %v814 = vlaneseq
        %v815 = vshrl.u32 %v814, 7
        %v816 = vsub.s32 %v813, %v815
        %v817 = vrot.slane %v803, %v816
        %v818 = vcombine.low %v810, %v817
        %v820 = vunpack.c.l.s4 1966171168
        %v821 = vunpack.c.0.s8 %v820
        %v822 = vlaneseq
        %v823 = vshrl.u32 %v822, 7
        %v824 = vsub.s32 %v821, %v823
        %v825 = vrot.slane %v818, %v824
        %v827 = vlaneseq
        %vm828 = vcmp.ge.s32.totalorder %v827, 0
        %vm829 = vcmp.lt.s32.totalorder %v827, 512
        %vm830 = vmand %vm828, %vm829
        %831 = vst.msk [vmem:[%s217] sm:$0xf] %vm830, %v825
        %s832 = sand.u32 %s138, 1
        %s833 = scalar_lea.sflag [#allocation4], %s832
        %s834 = sand.u32 %s138, 1
        %s835 = smul.addr %s834, 4
        %s836 = scalar_lea.vmem [#allocation3], %s835
        // Predicated region
        $region41: #{tpu_custom_call.1} parent=39 // pred_check
          %p837 = pneg %p148
        $region42: #{tpu_custom_call.1} parent=39 // pred_check_branch
          %839 = sbr.rel (%p837) target = $region44
        $region43: #{tpu_custom_call.1} parent=39 // pred_region
          %s840 = smul.u32 4, %s20
          %s842 = ssub.s32 64, 64
          %843 = vsyncadd %s833, %s842
          %s844 = smul.addr %s840, 16
          %s845 = scalar_lea.hbm %s5, %s844
          %s847 = sshll.u32 %s836, 4
          %s848 = int_to_ptr.vmem [resolvable:$true] %s847
          %850 = dma.vmem_to_hbm [thread:$0]  %s848, 64, %s845, %s833
        $region44: #{tpu_custom_call.1} parent=39 // pred_fallthru
          _
      $region40: #{tpu_custom_call.1} parent=5 // pred_fallthru
        _
      %p851 = scmp.le.s32.totalorder 2, %s15
      // Predicated region
      $region45: #{tpu_custom_call.1} parent=5 // pred_check
        %p852 = pneg %p851
      $region46: #{tpu_custom_call.1} parent=5 // pred_check_branch
        %854 = sbr.rel (%p852) target = $region48
      $region47: #{tpu_custom_call.1} parent=5 // pred_region
        %s855 = ssub.s32 %s15, 2
        // Predicated region
        $region49: #{tpu_custom_call.1} parent=47 // pred_check
          %p856 = pneg %p154
        $region50: #{tpu_custom_call.1} parent=47 // pred_check_branch
          %858 = sbr.rel (%p856) target = $region52
        $region51: #{tpu_custom_call.1} parent=47 // pred_region
          %s859 = sand.u32 %s139, 1
          %s860 = scalar_lea.sflag [#allocation4], %s859
          %s861 = sand.u32 %s139, 1
          %s862 = smul.addr %s861, 4
          %s863 = scalar_lea.vmem [#allocation3], %s862
          %864 = dma.done %s860, 64
        $region52: #{tpu_custom_call.1} parent=47 // pred_fallthru
          _
      $region48: #{tpu_custom_call.1} parent=5 // pred_fallthru
        _
    $region6: #{tpu_custom_call.1} parent=1 // loop_footer
      %s19 = sadd.s32 1, %s15
    $region7: #{tpu_custom_call.1} parent=1 // loop_footer_branch
      %14 = sbr.rel target = $region3
    $region8: #{tpu_custom_call.1} parent=1 // loop_exit
      _
    %865 = vsyncpa [#allocation4], 1
    %s866 = scalar_lea.sflag [#allocation4], 1
    %867 = vsyncpa %s866, 1

</llo_original>
